<compile_context>
chip_gen: v5e
topology: v5e:2x2
jax: 0.10.0
libtpu: 0.0.40
codegen_flags: <defaults>
</compile_context>

<pallas_src>
import math
from functools import partial

import jax
import jax.numpy as jnp
from jax.experimental import pallas as pl
from jax.experimental.pallas import tpu as pltpu

_LANE = 128
_SUBLANE = 8
_BN_EPS = 1e-5


def _round_up(v, m):
    return ((v + m - 1) // m) * m


def _gcn_fused_kernel(num_layers, batch, n_pad, inv_count, *refs):
    """All GCN layers fused in one kernel (statically unrolled layer loop).

    refs layout:
      refs[0]              x_ref   (B*Np, Dp0)      f32  lane/sublane-padded feats
      refs[1]              a_ref   (B, Np, Np)      bf16 (I + A), zero rows/cols
                                                         for padded nodes
      refs[2+4l .. 2+4l+3] per-layer (w, b, gamma, beta):
                           w       (Dp_in, Dp_out)  bf16
                           b/g/be  (1, Dp_out)      f32
      refs[-1]             out_ref (B*Np, Dp_last)  f32  flat, lane/sublane dense
    """
    x_ref, a_ref = refs[0], refs[1]
    out_ref = refs[-1]
    layer_refs = refs[2:-1]

    a_bf = a_ref[...]                      # already bf16: no in-kernel cast/copy
    y = x_ref[...]                         # (B*Np, Dp0) f32

    for l in range(num_layers):            # static, unrolled
        w_ref, b_ref, g_ref, be_ref = layer_refs[4 * l:4 * l + 4]

        # Linear: one flattened (B*Np, Din) @ (Din, Dout) MXU matmul, f32 acc.
        y = jnp.dot(y.astype(jnp.bfloat16), w_ref[...],
                    preferred_element_type=jnp.float32) + b_ref[...]

        # Aggregation with the residual pre-fused on the host: (I + A) @ y.
        # Per-graph batched matmul: B*N^2 MXU work, not (B*N)^2.
        d_out = y.shape[-1]
        y3 = y.reshape(batch, n_pad, d_out).astype(jnp.bfloat16)  # layout no-op
        y = jnp.einsum('bij,bjd->bid', a_bf, y3,
                       preferred_element_type=jnp.float32)
        y = y.reshape(batch * n_pad, d_out)

        # BatchNorm1d training statistics over the B*N real rows.  Padded rows
        # are exactly zero here (their (I+A) rows are all-zero), so they add
        # nothing to the sums; inv_count divides by the real row count.
        # Fused affine + ReLU in one VPU pass; rsqrt goes to the EUP.
        # TODO(synk): running_mean/running_var are not updated (forward only);
        # switch to a centered/Welford variance if |mean| >> std matters.
        mean = jnp.sum(y, axis=0, keepdims=True) * inv_count          # (1, Dp)
        var = jnp.sum(y * y, axis=0, keepdims=True) * inv_count - mean * mean
        var = jnp.maximum(var, 0.0)
        scale = g_ref[...] * jax.lax.rsqrt(var + _BN_EPS)             # (1, Dp)
        shift = be_ref[...] - mean * scale                            # (1, Dp)
        y = jnp.maximum(y * scale + shift, 0.0)

    out_ref[...] = y                       # single flat, unmasked dense store


def gcn_forward(adjacency, x, params):
    """Equivalent of GraphConvolutionNetwork.forward(A, x) -> (h, x)."""
    # TODO(synk): for large B*N this monolithic call should become a row-tiled
    # grid with a two-pass BN (pass 1 accumulates per-channel sum/sumsq into a
    # resident 'arbitrary' accumulator, pass 2 normalizes), row tile >= 256 on
    # v6e/v7x and the row/B axis marked 'parallel' for v7x's 2 TensorCores.
    B, N, d0 = x.shape
    num_layers = len(params)
    dims = [d0] + [w.shape[1] for (w, _, _, _) in params]
    dims_pad = [_round_up(d, _LANE) for d in dims]
    d_last, dp_last = dims[-1], dims_pad[-1]
    n_pad = _round_up(N, _SUBLANE)

    # Per-layer parameters padded to their OWN lane-rounded shapes (no uniform
    # (Dp, Dp) blow-up); weights shipped pre-cast to bf16 (halves weight DMA;
    # rounding is identical to an in-kernel cast).  Padded output channels get
    # zero weight/bias/gamma/beta, so they stay exactly 0 through BN and ReLU.
    flat_params = []
    for l, (w, b, gamma, beta) in enumerate(params):
        din, dout = w.shape
        dpi, dpo = dims_pad[l], dims_pad[l + 1]
        w_p = jnp.zeros((dpi, dpo), jnp.float32).at[:din, :dout].set(w)
        flat_params.append(w_p.astype(jnp.bfloat16))
        flat_params.append(
            jnp.zeros((1, dpo), jnp.float32).at[0, :dout].set(b.reshape(-1)))
        flat_params.append(
            jnp.zeros((1, dpo), jnp.float32).at[0, :dout].set(gamma.reshape(-1)))
        flat_params.append(
            jnp.zeros((1, dpo), jnp.float32).at[0, :dout].set(beta.reshape(-1)))

    # Flattened, lane- and sublane-padded node features.
    x_p = jnp.zeros((B, n_pad, dims_pad[0]), jnp.float32).at[:, :N, :d0].set(x)
    x_flat = x_p.reshape(B * n_pad, dims_pad[0])

    # Per-graph (I + A): residual fused into the aggregation operand.  Padded
    # node rows/cols are all-zero, so padded rows never leak into real nodes
    # nor into the BN statistics.  0/1/2 entries are exact in bf16.
    # TODO(synk): on v7x this operand could be fp8 (e4m3) if mixed fp8 x bf16
    # dot lowering is supported; bf16 kept as the portable fallback.
    a_hat = adjacency + jnp.eye(N, dtype=adjacency.dtype)[None]
    a_hat_p = jnp.zeros((B, n_pad, n_pad), jnp.float32).at[:, :N, :N].set(a_hat)
    a_hat_bf = a_hat_p.astype(jnp.bfloat16)

    vmem = pl.BlockSpec(memory_space=pltpu.MemorySpace.VMEM)
    kernel = partial(_gcn_fused_kernel, num_layers, B, n_pad, 1.0 / (B * N))
    out_flat = pl.pallas_call(
        kernel,
        out_shape=jax.ShapeDtypeStruct((B * n_pad, dp_last), jnp.float32),
        in_specs=[vmem] * (2 + 4 * num_layers),
        out_specs=vmem,
        compiler_params=pltpu.CompilerParams(
            vmem_limit_bytes=64 * 1024 * 1024),
    )(x_flat, a_hat_bf, *flat_params)

    # Padding removal, (B, N, d) view and node-sum readout stay in the wrapper
    # so the kernel's store remains fully lane/sublane dense.
    x_out = out_flat.reshape(B, n_pad, dp_last)[:, :N, :d_last]
    h = jnp.sum(x_out, axis=1)
    return h, x_out


def init_gcn_params(key, node_feature_dim, hidden_dim):
    """Deterministic parameter init mirroring the PyTorch module's __init__."""
    dims = [node_feature_dim] + list(hidden_dim)
    params = []
    for in_dim, out_dim in zip(dims[:-1], dims[1:]):
        key, kw, kb = jax.random.split(key, 3)
        # xavier_normal_ on weight of shape (out, in); kernel uses (in, out).
        std = math.sqrt(2.0 / (in_dim + out_dim))
        w = (jax.random.normal(kw, (out_dim, in_dim), jnp.float32) * std).T
        # nn.Linear default bias init: U(-1/sqrt(fan_in), 1/sqrt(fan_in)).
        bound = 1.0 / math.sqrt(in_dim)
        b = jax.random.uniform(kb, (1, out_dim), jnp.float32, -bound, bound)
        gamma = jnp.ones((1, out_dim), jnp.float32)
        beta = jnp.zeros((1, out_dim), jnp.float32)
        params.append((w, b, gamma, beta))
    return params


if __name__ == "__main__":
    # Small shapes consistent with the module: B graphs, N nodes each.
    B, N = 2, 8
    node_feature_dim = 16
    hidden_dim = [32, 32]

    key = jax.random.PRNGKey(0)
    kx, ka, kp = jax.random.split(key, 3)

    x = jax.random.normal(kx, (B, N, node_feature_dim), jnp.float32)
    # Symmetric 0/1 adjacency with zero diagonal (typical graph input).
    a = jax.random.uniform(ka, (B, N, N), jnp.float32)
    adj = (a + jnp.swapaxes(a, 1, 2) > 1.0).astype(jnp.float32)
    adj = adj * (1.0 - jnp.eye(N, dtype=jnp.float32)[None])

    params = init_gcn_params(kp, node_feature_dim, hidden_dim)

    h, x_out = gcn_forward(adj, x, params)
    jax.block_until_ready((h, x_out))

    assert h.shape == (B, hidden_dim[-1])
    assert x_out.shape == (B, N, hidden_dim[-1])
    assert bool(jnp.all(jnp.isfinite(h))) and bool(jnp.all(jnp.isfinite(x_out)))
    print("KERNEL_OK")
</pallas_src>

<mosaic_0001>
module attributes {stable_mosaic.version = 11 : i64} {
  func.func @_gcn_fused_kernel(%arg0: memref<16x128xf32, #tpu.memory_space<vmem>>, %arg1: memref<2x8x8xbf16, #tpu.memory_space<vmem>>, %arg2: memref<128x128xbf16, #tpu.memory_space<vmem>>, %arg3: memref<1x128xf32, #tpu.memory_space<vmem>>, %arg4: memref<1x128xf32, #tpu.memory_space<vmem>>, %arg5: memref<1x128xf32, #tpu.memory_space<vmem>>, %arg6: memref<128x128xbf16, #tpu.memory_space<vmem>>, %arg7: memref<1x128xf32, #tpu.memory_space<vmem>>, %arg8: memref<1x128xf32, #tpu.memory_space<vmem>>, %arg9: memref<1x128xf32, #tpu.memory_space<vmem>>, %arg10: memref<16x128xf32, #tpu.memory_space<vmem>>) attributes {dimension_semantics = [], scalar_prefetch = 0 : i64, scratch_operands = 0 : i64, tpu.core_type = #tpu.core_type<tc>} {
    %c0 = arith.constant 0 : index
    %c0_0 = arith.constant 0 : index
    %c0_1 = arith.constant 0 : index
    %0 = vector.load %arg1[%c0, %c0_0, %c0_1] : memref<2x8x8xbf16, #tpu.memory_space<vmem>>, vector<2x8x8xbf16>
    %c0_2 = arith.constant 0 : index
    %c0_3 = arith.constant 0 : index
    %1 = vector.load %arg0[%c0_2, %c0_3] : memref<16x128xf32, #tpu.memory_space<vmem>>, vector<16x128xf32>
    %2 = arith.truncf %1 : vector<16x128xf32> to vector<16x128xbf16>
    %c0_4 = arith.constant 0 : index
    %c0_5 = arith.constant 0 : index
    %3 = vector.load %arg2[%c0_4, %c0_5] : memref<128x128xbf16, #tpu.memory_space<vmem>>, vector<128x128xbf16>
    %cst = arith.constant dense<0.000000e+00> : vector<16x128xf32>
    %4 = tpu.matmul %2, %3, %cst {dimension_numbers = #tpu.dot_dimension_numbers<[1], [0], [0], [1], [0, 0, 1, 1], [], []>} : vector<16x128xbf16>, vector<128x128xbf16>, vector<16x128xf32> -> vector<16x128xf32>
    %c0_6 = arith.constant 0 : index
    %c0_7 = arith.constant 0 : index
    %5 = vector.load %arg3[%c0_6, %c0_7] : memref<1x128xf32, #tpu.memory_space<vmem>>, vector<1x128xf32>
    %6 = vector.broadcast %5 : vector<1x128xf32> to vector<16x128xf32>
    %7 = arith.addf %4, %6 : vector<16x128xf32>
    %8 = vector.shape_cast %7 : vector<16x128xf32> to vector<2x8x128xf32>
    %9 = arith.truncf %8 : vector<2x8x128xf32> to vector<2x8x128xbf16>
    "tpu.trace_start"() <{level = 10 : i32, message = "bij,bjd->bid"}> : () -> ()
    %cst_8 = arith.constant dense<0.000000e+00> : vector<2x8x128xf32>
    %10 = tpu.matmul %0, %9, %cst_8 {dimension_numbers = #tpu.dot_dimension_numbers<[2], [1], [1], [2], [0, 0, 0, 1, 1, 2], [0], [0]>} : vector<2x8x8xbf16>, vector<2x8x128xbf16>, vector<2x8x128xf32> -> vector<2x8x128xf32>
    "tpu.trace_stop"() : () -> ()
    %11 = vector.shape_cast %10 : vector<2x8x128xf32> to vector<16x128xf32>
    %cst_9 = arith.constant dense<0.000000e+00> : vector<128xf32>
    %12 = vector.multi_reduction <add>, %11, %cst_9 [0] : vector<16x128xf32> to vector<128xf32>
    %13 = vector.shape_cast %12 : vector<128xf32> to vector<1x128xf32>
    %cst_10 = arith.constant 6.250000e-02 : f32
    %14 = vector.broadcast %cst_10 : f32 to vector<1x128xf32>
    %15 = arith.mulf %13, %14 : vector<1x128xf32>
    %16 = arith.mulf %11, %11 : vector<16x128xf32>
    %cst_11 = arith.constant dense<0.000000e+00> : vector<128xf32>
    %17 = vector.multi_reduction <add>, %16, %cst_11 [0] : vector<16x128xf32> to vector<128xf32>
    %18 = vector.shape_cast %17 : vector<128xf32> to vector<1x128xf32>
    %cst_12 = arith.constant 6.250000e-02 : f32
    %19 = vector.broadcast %cst_12 : f32 to vector<1x128xf32>
    %20 = arith.mulf %18, %19 : vector<1x128xf32>
    %21 = arith.mulf %15, %15 : vector<1x128xf32>
    %22 = arith.subf %20, %21 : vector<1x128xf32>
    %cst_13 = arith.constant 0.000000e+00 : f32
    %23 = vector.broadcast %cst_13 : f32 to vector<1x128xf32>
    %24 = arith.maximumf %22, %23 : vector<1x128xf32>
    %c0_14 = arith.constant 0 : index
    %c0_15 = arith.constant 0 : index
    %25 = vector.load %arg4[%c0_14, %c0_15] : memref<1x128xf32, #tpu.memory_space<vmem>>, vector<1x128xf32>
    %cst_16 = arith.constant 9.99999974E-6 : f32
    %26 = vector.broadcast %cst_16 : f32 to vector<1x128xf32>
    %27 = arith.addf %24, %26 : vector<1x128xf32>
    %28 = math.rsqrt %27 : vector<1x128xf32>
    %29 = arith.mulf %25, %28 : vector<1x128xf32>
    %c0_17 = arith.constant 0 : index
    %c0_18 = arith.constant 0 : index
    %30 = vector.load %arg5[%c0_17, %c0_18] : memref<1x128xf32, #tpu.memory_space<vmem>>, vector<1x128xf32>
    %31 = arith.mulf %15, %29 : vector<1x128xf32>
    %32 = arith.subf %30, %31 : vector<1x128xf32>
    %33 = vector.broadcast %29 : vector<1x128xf32> to vector<16x128xf32>
    %34 = arith.mulf %11, %33 : vector<16x128xf32>
    %35 = vector.broadcast %32 : vector<1x128xf32> to vector<16x128xf32>
    %36 = arith.addf %34, %35 : vector<16x128xf32>
    %cst_19 = arith.constant 0.000000e+00 : f32
    %37 = vector.broadcast %cst_19 : f32 to vector<16x128xf32>
    %38 = arith.maximumf %36, %37 : vector<16x128xf32>
    %39 = arith.truncf %38 : vector<16x128xf32> to vector<16x128xbf16>
    %c0_20 = arith.constant 0 : index
    %c0_21 = arith.constant 0 : index
    %40 = vector.load %arg6[%c0_20, %c0_21] : memref<128x128xbf16, #tpu.memory_space<vmem>>, vector<128x128xbf16>
    %cst_22 = arith.constant dense<0.000000e+00> : vector<16x128xf32>
    %41 = tpu.matmul %39, %40, %cst_22 {dimension_numbers = #tpu.dot_dimension_numbers<[1], [0], [0], [1], [0, 0, 1, 1], [], []>} : vector<16x128xbf16>, vector<128x128xbf16>, vector<16x128xf32> -> vector<16x128xf32>
    %c0_23 = arith.constant 0 : index
    %c0_24 = arith.constant 0 : index
    %42 = vector.load %arg7[%c0_23, %c0_24] : memref<1x128xf32, #tpu.memory_space<vmem>>, vector<1x128xf32>
    %43 = vector.broadcast %42 : vector<1x128xf32> to vector<16x128xf32>
    %44 = arith.addf %41, %43 : vector<16x128xf32>
    %45 = vector.shape_cast %44 : vector<16x128xf32> to vector<2x8x128xf32>
    %46 = arith.truncf %45 : vector<2x8x128xf32> to vector<2x8x128xbf16>
    "tpu.trace_start"() <{level = 10 : i32, message = "bij,bjd->bid"}> : () -> ()
    %cst_25 = arith.constant dense<0.000000e+00> : vector<2x8x128xf32>
    %47 = tpu.matmul %0, %46, %cst_25 {dimension_numbers = #tpu.dot_dimension_numbers<[2], [1], [1], [2], [0, 0, 0, 1, 1, 2], [0], [0]>} : vector<2x8x8xbf16>, vector<2x8x128xbf16>, vector<2x8x128xf32> -> vector<2x8x128xf32>
    "tpu.trace_stop"() : () -> ()
    %48 = vector.shape_cast %47 : vector<2x8x128xf32> to vector<16x128xf32>
    %cst_26 = arith.constant dense<0.000000e+00> : vector<128xf32>
    %49 = vector.multi_reduction <add>, %48, %cst_26 [0] : vector<16x128xf32> to vector<128xf32>
    %50 = vector.shape_cast %49 : vector<128xf32> to vector<1x128xf32>
    %cst_27 = arith.constant 6.250000e-02 : f32
    %51 = vector.broadcast %cst_27 : f32 to vector<1x128xf32>
    %52 = arith.mulf %50, %51 : vector<1x128xf32>
    %53 = arith.mulf %48, %48 : vector<16x128xf32>
    %cst_28 = arith.constant dense<0.000000e+00> : vector<128xf32>
    %54 = vector.multi_reduction <add>, %53, %cst_28 [0] : vector<16x128xf32> to vector<128xf32>
    %55 = vector.shape_cast %54 : vector<128xf32> to vector<1x128xf32>
    %cst_29 = arith.constant 6.250000e-02 : f32
    %56 = vector.broadcast %cst_29 : f32 to vector<1x128xf32>
    %57 = arith.mulf %55, %56 : vector<1x128xf32>
    %58 = arith.mulf %52, %52 : vector<1x128xf32>
    %59 = arith.subf %57, %58 : vector<1x128xf32>
    %cst_30 = arith.constant 0.000000e+00 : f32
    %60 = vector.broadcast %cst_30 : f32 to vector<1x128xf32>
    %61 = arith.maximumf %59, %60 : vector<1x128xf32>
    %c0_31 = arith.constant 0 : index
    %c0_32 = arith.constant 0 : index
    %62 = vector.load %arg8[%c0_31, %c0_32] : memref<1x128xf32, #tpu.memory_space<vmem>>, vector<1x128xf32>
    %cst_33 = arith.constant 9.99999974E-6 : f32
    %63 = vector.broadcast %cst_33 : f32 to vector<1x128xf32>
    %64 = arith.addf %61, %63 : vector<1x128xf32>
    %65 = math.rsqrt %64 : vector<1x128xf32>
    %66 = arith.mulf %62, %65 : vector<1x128xf32>
    %c0_34 = arith.constant 0 : index
    %c0_35 = arith.constant 0 : index
    %67 = vector.load %arg9[%c0_34, %c0_35] : memref<1x128xf32, #tpu.memory_space<vmem>>, vector<1x128xf32>
    %68 = arith.mulf %52, %66 : vector<1x128xf32>
    %69 = arith.subf %67, %68 : vector<1x128xf32>
    %70 = vector.broadcast %66 : vector<1x128xf32> to vector<16x128xf32>
    %71 = arith.mulf %48, %70 : vector<16x128xf32>
    %72 = vector.broadcast %69 : vector<1x128xf32> to vector<16x128xf32>
    %73 = arith.addf %71, %72 : vector<16x128xf32>
    %cst_36 = arith.constant 0.000000e+00 : f32
    %74 = vector.broadcast %cst_36 : f32 to vector<16x128xf32>
    %75 = arith.maximumf %73, %74 : vector<16x128xf32>
    %c0_37 = arith.constant 0 : index
    %c0_38 = arith.constant 0 : index
    %76 = vector.load %arg10[%c0_37, %c0_38] : memref<16x128xf32, #tpu.memory_space<vmem>>, vector<16x128xf32>
    tpu.vector_store %arg10[%c0_37, %c0_38], %75 {strides = array<i32>} : memref<16x128xf32, #tpu.memory_space<vmem>>, vector<16x128xf32>,
    return
  }
}

</mosaic_0001>

<llo_original>
// kernel: tpu_custom_call.1
$region0: #{tpu_custom_call.1}
  #allocation0 [shape = 'u32[]', space=smem, size = 0x4, offset = 0x4, fixed_abs, tag = 'smem constant byte address 0x4 - core index']
  #allocation1 [shape = 'u32[72,128]{1,0:T(1,128)}', space=vmem, size = 0x9000, scoped, tag = 'internal scratch']
  %s0 = inlined_call_operand.hbm [shape: f32[16,128], index: 0, kind: input, shape index: {}]
  %s1 = inlined_call_operand.hbm [shape: bf16[2,8,8], index: 1, kind: input, shape index: {}]
  %s2 = inlined_call_operand.hbm [shape: bf16[128,128], index: 2, kind: input, shape index: {}]
  %s3 = inlined_call_operand.vmem [shape: f32[1,128], index: 3, kind: input, shape index: {}]
  %s4 = inlined_call_operand.vmem [shape: f32[1,128], index: 4, kind: input, shape index: {}]
  %s5 = inlined_call_operand.vmem [shape: f32[1,128], index: 5, kind: input, shape index: {}]
  %s6 = inlined_call_operand.hbm [shape: bf16[128,128], index: 6, kind: input, shape index: {}]
  %s7 = inlined_call_operand.vmem [shape: f32[1,128], index: 7, kind: input, shape index: {}]
  %s8 = inlined_call_operand.vmem [shape: f32[1,128], index: 8, kind: input, shape index: {}]
  %s9 = inlined_call_operand.vmem [shape: f32[1,128], index: 9, kind: input, shape index: {}]
  %s10 = inlined_call_operand.hbm [shape: f32[16,128], index: 10, kind: output, shape index: {}]
  %s11 = sld [smem:[#allocation0]]
  $region66: #{tpu_custom_call.1} parent=0
    _
  %s13 = ssub.s32 1, %s11
  %s14 = scalar_select 0, %s13, %s11
  $region1: #{tpu_custom_call.1} parent=0
    #allocation2 [shape = 'u8[8192]{0}', space=vmem, size = 0x2000, scoped, tag = 'input window, operand 0, single buffered']
    #allocation3 [shape = 's32[1]{0}', space=sflag, size = 0x4, scoped, tag = 'scoped memory for tpu_custom_call.1']
    #allocation4 [shape = 's32[1]{0}', space=sflag, size = 0x4, scoped, tag = 'scoped memory for tpu_custom_call.1']
    #allocation5 [shape = 'u8[4096]{0}', space=vmem, size = 0x1000, scoped, tag = 'input window, operand 1, single buffered']
    #allocation6 [shape = 's32[1]{0}', space=sflag, size = 0x4, scoped, tag = 'scoped memory for tpu_custom_call.1']
    #allocation7 [shape = 'u8[32768]{0}', space=vmem, size = 0x8000, scoped, tag = 'input window, operand 2, single buffered']
    #allocation8 [shape = 'u8[32768]{0}', space=vmem, size = 0x8000, scoped, tag = 'input window, operand 6, single buffered']
    #allocation9 [shape = 's32[1]{0}', space=sflag, size = 0x4, scoped, tag = 'scoped memory for tpu_custom_call.1']
    #allocation10 [shape = 'u8[8192]{0}', space=vmem, size = 0x2000, scoped, tag = 'output window, operand 0, single buffered']
    %15 = vsyncpa [#allocation3], 0
    %16 = vsyncpa [#allocation6], 0
    %17 = vsyncpa [#allocation9], 0
    %18 = vsyncpa [#allocation4], 0
    // Predicated region
    $region2: #{tpu_custom_call.1} parent=1 // pred_check
      _
    $region3: #{tpu_custom_call.1} parent=1 // pred_check_branch
      %20 = sbr.rel (0) target = $region5
    $region4: #{tpu_custom_call.1} parent=1 // pred_region
      %22 = vsyncadd [#allocation3], 0
      %s23 = sshll.u32 %s0, 4
      %s24 = int_to_ptr.hbm [resolvable:$true] %s23
      %s25 = sshll.u32 [#allocation2], 4
      %s26 = int_to_ptr.vmem [resolvable:$true] %s25
      %31 = dma.hbm_to_vmem [thread:$0]  %s24, 256, %s26, [#allocation3], 128, 128, 8
    $region5: #{tpu_custom_call.1} parent=1 // pred_fallthru
      _
    // Predicated region
    $region6: #{tpu_custom_call.1} parent=1 // pred_check
      _
    $region7: #{tpu_custom_call.1} parent=1 // pred_check_branch
      %33 = sbr.rel (0) target = $region9
    $region8: #{tpu_custom_call.1} parent=1 // pred_region
      %35 = vsyncadd [#allocation6], 0
      %s36 = sshll.u32 %s1, 4
      %s37 = int_to_ptr.hbm [resolvable:$true] %s36
      %s38 = sshll.u32 [#allocation5], 4
      %s39 = int_to_ptr.vmem [resolvable:$true] %s38
      %44 = dma.hbm_to_vmem [thread:$0]  %s37, 128, %s39, [#allocation6], 64, 64, 4
    $region9: #{tpu_custom_call.1} parent=1 // pred_fallthru
      _
    // Predicated region
    $region10: #{tpu_custom_call.1} parent=1 // pred_check
      _
    $region11: #{tpu_custom_call.1} parent=1 // pred_check_branch
      %46 = sbr.rel (0) target = $region13
    $region12: #{tpu_custom_call.1} parent=1 // pred_region
      %48 = vsyncadd [#allocation6], 0
      %s49 = sshll.u32 %s2, 4
      %s50 = int_to_ptr.hbm [resolvable:$true] %s49
      %s51 = sshll.u32 [#allocation7], 4
      %s52 = int_to_ptr.vmem [resolvable:$true] %s51
      %57 = dma.hbm_to_vmem [thread:$0]  %s50, 1024, %s52, [#allocation6], 64, 64, 4
    $region13: #{tpu_custom_call.1} parent=1 // pred_fallthru
      _
    // Predicated region
    $region14: #{tpu_custom_call.1} parent=1 // pred_check
      _
    $region15: #{tpu_custom_call.1} parent=1 // pred_check_branch
      %59 = sbr.rel (0) target = $region17
    $region16: #{tpu_custom_call.1} parent=1 // pred_region
      _
    $region17: #{tpu_custom_call.1} parent=1 // pred_fallthru
      _
    // Predicated region
    $region18: #{tpu_custom_call.1} parent=1 // pred_check
      _
    $region19: #{tpu_custom_call.1} parent=1 // pred_check_branch
      %61 = sbr.rel (0) target = $region21
    $region20: #{tpu_custom_call.1} parent=1 // pred_region
      _
    $region21: #{tpu_custom_call.1} parent=1 // pred_fallthru
      _
    // Predicated region
    $region22: #{tpu_custom_call.1} parent=1 // pred_check
      _
    $region23: #{tpu_custom_call.1} parent=1 // pred_check_branch
      %63 = sbr.rel (0) target = $region25
    $region24: #{tpu_custom_call.1} parent=1 // pred_region
      _
    $region25: #{tpu_custom_call.1} parent=1 // pred_fallthru
      _
    // Predicated region
    $region26: #{tpu_custom_call.1} parent=1 // pred_check
      _
    $region27: #{tpu_custom_call.1} parent=1 // pred_check_branch
      %65 = sbr.rel (0) target = $region29
    $region28: #{tpu_custom_call.1} parent=1 // pred_region
      %67 = vsyncadd [#allocation9], 0
      %s68 = sshll.u32 %s6, 4
      %s69 = int_to_ptr.hbm [resolvable:$true] %s68
      %s70 = sshll.u32 [#allocation8], 4
      %s71 = int_to_ptr.vmem [resolvable:$true] %s70
      %76 = dma.hbm_to_vmem [thread:$0]  %s69, 1024, %s71, [#allocation9], 64, 64, 4
    $region29: #{tpu_custom_call.1} parent=1 // pred_fallthru
      _
    // Predicated region
    $region30: #{tpu_custom_call.1} parent=1 // pred_check
      _
    $region31: #{tpu_custom_call.1} parent=1 // pred_check_branch
      %78 = sbr.rel (0) target = $region33
    $region32: #{tpu_custom_call.1} parent=1 // pred_region
      _
    $region33: #{tpu_custom_call.1} parent=1 // pred_fallthru
      _
    // Predicated region
    $region34: #{tpu_custom_call.1} parent=1 // pred_check
      _
    $region35: #{tpu_custom_call.1} parent=1 // pred_check_branch
      %80 = sbr.rel (0) target = $region37
    $region36: #{tpu_custom_call.1} parent=1 // pred_region
      _
    $region37: #{tpu_custom_call.1} parent=1 // pred_fallthru
      _
    // Predicated region
    $region38: #{tpu_custom_call.1} parent=1 // pred_check
      _
    $region39: #{tpu_custom_call.1} parent=1 // pred_check_branch
      %82 = sbr.rel (0) target = $region41
    $region40: #{tpu_custom_call.1} parent=1 // pred_region
      _
    $region41: #{tpu_custom_call.1} parent=1 // pred_fallthru
      _
    // Predicated region
    $region42: #{tpu_custom_call.1} parent=1 // pred_check
      _
    $region43: #{tpu_custom_call.1} parent=1 // pred_check_branch
      %84 = sbr.rel (0) target = $region45
    $region44: #{tpu_custom_call.1} parent=1 // pred_region
      %86 = dma.done [#allocation3], 256
    $region45: #{tpu_custom_call.1} parent=1 // pred_fallthru
      _
    // Predicated region
    $region46: #{tpu_custom_call.1} parent=1 // pred_check
      _
    $region47: #{tpu_custom_call.1} parent=1 // pred_check_branch
      %88 = sbr.rel (0) target = $region49
    $region48: #{tpu_custom_call.1} parent=1 // pred_region
      %90 = dma.done [#allocation6], 128
    $region49: #{tpu_custom_call.1} parent=1 // pred_fallthru
      _
    // Predicated region
    $region50: #{tpu_custom_call.1} parent=1 // pred_check
      _
    $region51: #{tpu_custom_call.1} parent=1 // pred_check_branch
      %92 = sbr.rel (0) target = $region53
    $region52: #{tpu_custom_call.1} parent=1 // pred_region
      %94 = dma.done [#allocation6], 1024
    $region53: #{tpu_custom_call.1} parent=1 // pred_fallthru
      _
    // Predicated region
    $region54: #{tpu_custom_call.1} parent=1 // pred_check
      _
    $region55: #{tpu_custom_call.1} parent=1 // pred_check_branch
      %96 = sbr.rel (0) target = $region57
    $region56: #{tpu_custom_call.1} parent=1 // pred_region
      %98 = dma.done [#allocation9], 1024
    $region57: #{tpu_custom_call.1} parent=1 // pred_fallthru
      _
    %v100 = vld [vmem:[#allocation5] sm:$0xf]
    %v101 = vld [vmem:[#allocation5 + $0x4] sm:$0xf]
    %v102 = vld [vmem:[#allocation2] sm:$0xff]
    %v103 = vld [vmem:[#allocation2 + $0x8] sm:$0xff]
    %v104 = vpack.c.bf16 %v103, %v102
    %v105 = vld [vmem:[#allocation7] sm:$0xf]
    %v106 = vld [vmem:[#allocation7 + $0x4] sm:$0xf]
    %v107 = vld [vmem:[#allocation7 + $0x8] sm:$0xf]
    %v108 = vld [vmem:[#allocation7 + $0xc] sm:$0xf]
    %v109 = vld [vmem:[#allocation7 + $0x10] sm:$0xf]
    %v110 = vld [vmem:[#allocation7 + $0x14] sm:$0xf]
    %v111 = vld [vmem:[#allocation7 + $0x18] sm:$0xf]
    %v112 = vld [vmem:[#allocation7 + $0x1c] sm:$0xf]
    %v113 = vld [vmem:[#allocation7 + $0x20] sm:$0xf]
    %v114 = vld [vmem:[#allocation7 + $0x24] sm:$0xf]
    %v115 = vld [vmem:[#allocation7 + $0x28] sm:$0xf]
    %v116 = vld [vmem:[#allocation7 + $0x2c] sm:$0xf]
    %v117 = vld [vmem:[#allocation7 + $0x30] sm:$0xf]
    %v118 = vld [vmem:[#allocation7 + $0x34] sm:$0xf]
    %v119 = vld [vmem:[#allocation7 + $0x38] sm:$0xf]
    %v120 = vld [vmem:[#allocation7 + $0x3c] sm:$0xf]
    %v121 = vld [vmem:[%s3] sm:$0x1]
    %v123 = vperm.slane %v121, 0
    %v141 = vunpack.c.l.b16 %v105
    %v142 = vunpack.c.l.b16 %v106
    %v143 = vunpack.c.l.b16 %v107
    %v144 = vunpack.c.l.b16 %v108
    %v145 = vunpack.c.l.b16 %v109
    %v146 = vunpack.c.l.b16 %v110
    %v147 = vunpack.c.l.b16 %v111
    %v148 = vunpack.c.l.b16 %v112
    %v149 = vunpack.c.l.b16 %v113
    %v150 = vunpack.c.l.b16 %v114
    %v151 = vunpack.c.l.b16 %v115
    %v152 = vunpack.c.l.b16 %v116
    %v153 = vunpack.c.l.b16 %v117
    %v154 = vunpack.c.l.b16 %v118
    %v155 = vunpack.c.l.b16 %v119
    %v156 = vunpack.c.l.b16 %v120
    %v157 = vpack.c.b16 %v142, %v141
    %v158 = vpack.c.b16 %v144, %v143
    %v159 = vpack.c.b16 %v146, %v145
    %v160 = vpack.c.b16 %v148, %v147
    %v161 = vpack.c.b16 %v150, %v149
    %v162 = vpack.c.b16 %v152, %v151
    %v163 = vpack.c.b16 %v154, %v153
    %v164 = vpack.c.b16 %v156, %v155
    %173 = vmatpush.bf16.msra.mxu0 %v164
    %174 = vmatpush.bf16.msra.mxu0 %v163
    %175 = vmatpush.bf16.msra.mxu0 %v162
    %176 = vmatpush.bf16.msra.mxu0 %v161
    %177 = vmatpush.bf16.msra.mxu0 %v160
    %178 = vmatpush.bf16.msra.mxu0 %v159
    %179 = vmatpush.bf16.msra.mxu0 %v158
    %180 = vmatpush.bf16.msra.mxu0 %v157
    %181 = vmatmul.bf16.gmra.mxu0 %v104
    %v182 = vpop.f32.mrf.mxu0
    %v183 = vadd.f32 %v123, %v182
    %v184 = vpop.f32.mrf.mxu0
    %v185 = vadd.f32 %v123, %v184
    %186 = vdwg.mxu0
    %v187 = vpack.c.bf16 %v183, %v183
    %v188 = vpack.c.bf16 %v185, %v185
    %vm189 = vcmask 64512
    %v191 = vsel %vm189, %v100, 0
    %vm193 = vcmask 1043456
    %v195 = vsel %vm193, %v187, 0
    %197 = vmatpush.bf16.msra.mxu0 0
    %198 = vmatpush.bf16.msra.mxu0 0
    %199 = vmatpush.bf16.msra.mxu0 0
    %200 = vmatpush.bf16.msra.mxu0 0
    %201 = vmatpush.bf16.msra.mxu0 0
    %202 = vmatpush.bf16.msra.mxu0 0
    %203 = vmatpush.bf16.msra.mxu0 0
    %204 = vmatpush.bf16.msra.mxu0 %v195
    %205 = vmatmul.bf16.gmra.mxu0 %v191
    %v206 = vpop.f32.mrf.mxu0
    %v207 = vadd.f32 0.0, %v206
    %v208 = vpop.f32.mrf.mxu0
    %209 = vdwg.mxu0
    %v211 = vsel %vm189, %v101, 0
    %v214 = vsel %vm193, %v188, 0
    %216 = vmatpush.bf16.msra.mxu0 0
    %217 = vmatpush.bf16.msra.mxu0 0
    %218 = vmatpush.bf16.msra.mxu0 0
    %219 = vmatpush.bf16.msra.mxu0 0
    %220 = vmatpush.bf16.msra.mxu0 0
    %221 = vmatpush.bf16.msra.mxu0 0
    %222 = vmatpush.bf16.msra.mxu0 0
    %223 = vmatpush.bf16.msra.mxu0 %v214
    %224 = vmatmul.bf16.gmra.mxu0 %v211
    %v225 = vpop.f32.mrf.mxu0
    %v226 = vadd.f32 0.0, %v225
    %v227 = vpop.f32.mrf.mxu0
    %228 = vdwg.mxu0
    %v229 = vadd.f32 %v207, %v226
    %v230 = vrot.slane %v229, 4
    %v231 = vadd.f32 %v229, %v230
    %v232 = vrot.slane %v231, 2
    %v233 = vadd.f32 %v231, %v232
    %v234 = vrot.slane %v233, 1
    %v235 = vadd.f32 %v233, %v234
    %v236 = vmul.f32 %v235, 0.0625
    %v237 = vmul.f32 %v207, %v207
    %v238 = vmul.f32 %v226, %v226
    %v239 = vadd.f32 %v237, %v238
    %v240 = vrot.slane %v239, 4
    %v241 = vadd.f32 %v239, %v240
    %v242 = vrot.slane %v241, 2
    %v243 = vadd.f32 %v241, %v242
    %v244 = vrot.slane %v243, 1
    %v245 = vadd.f32 %v243, %v244
    %v246 = vmul.f32 %v245, 0.0625
    %v247 = vmul.f32 %v236, %v236
    %v248 = vsub.f32 %v246, %v247
    %v249 = vmax.f32 %v248, 0.0
    %v250 = vld [vmem:[%s4] sm:$0x1]
    %v251 = vadd.f32 %v249, 1e-05
    %v252 = vrsqrt.pop %v251
    %v253 = vmul.f32 %v252, %v251
    %v254 = vmul.f32 %v253, %v252
    %v255 = vmul.f32 0.5, %v254
    %v256 = vsub.f32 1.5, %v255
    %v257 = vmul.f32 %v252, %v256
    %vm258 = vweird.f32 %v251
    %vm259 = vweird.f32 %v252
    %vm260 = vmor %vm258, %vm259
    %v261 = vsel %vm260, %v252, %v257
    %v262 = vmul.f32 %v250, %v261
    %v263 = vld [vmem:[%s5] sm:$0x1]
    %v264 = vmul.f32 %v236, %v262
    %v265 = vsub.f32 %v263, %v264
    %v267 = vperm.slane %v262, 0
    %v269 = vmul.f32 %v207, %v267
    %v270 = vmul.f32 %v226, %v267
    %v272 = vperm.slane %v265, 0
    %v274 = vadd.f32 %v269, %v272
    %v275 = vadd.f32 %v270, %v272
    %v276 = vmax.f32 %v274, 0.0
    %v277 = vmax.f32 %v275, 0.0
    %v278 = vpack.c.bf16 %v277, %v276
    %v279 = vld [vmem:[#allocation8] sm:$0xf]
    %v280 = vld [vmem:[#allocation8 + $0x4] sm:$0xf]
    %v281 = vld [vmem:[#allocation8 + $0x8] sm:$0xf]
    %v282 = vld [vmem:[#allocation8 + $0xc] sm:$0xf]
    %v283 = vld [vmem:[#allocation8 + $0x10] sm:$0xf]
    %v284 = vld [vmem:[#allocation8 + $0x14] sm:$0xf]
    %v285 = vld [vmem:[#allocation8 + $0x18] sm:$0xf]
    %v286 = vld [vmem:[#allocation8 + $0x1c] sm:$0xf]
    %v287 = vld [vmem:[#allocation8 + $0x20] sm:$0xf]
    %v288 = vld [vmem:[#allocation8 + $0x24] sm:$0xf]
    %v289 = vld [vmem:[#allocation8 + $0x28] sm:$0xf]
    %v290 = vld [vmem:[#allocation8 + $0x2c] sm:$0xf]
    %v291 = vld [vmem:[#allocation8 + $0x30] sm:$0xf]
    %v292 = vld [vmem:[#allocation8 + $0x34] sm:$0xf]
    %v293 = vld [vmem:[#allocation8 + $0x38] sm:$0xf]
    %v294 = vld [vmem:[#allocation8 + $0x3c] sm:$0xf]
    %v295 = vld [vmem:[%s7] sm:$0x1]
    %v297 = vperm.slane %v295, 0
    %v315 = vunpack.c.l.b16 %v279
    %v316 = vunpack.c.l.b16 %v280
    %v317 = vunpack.c.l.b16 %v281
    %v318 = vunpack.c.l.b16 %v282
    %v319 = vunpack.c.l.b16 %v283
    %v320 = vunpack.c.l.b16 %v284
    %v321 = vunpack.c.l.b16 %v285
    %v322 = vunpack.c.l.b16 %v286
    %v323 = vunpack.c.l.b16 %v287
    %v324 = vunpack.c.l.b16 %v288
    %v325 = vunpack.c.l.b16 %v289
    %v326 = vunpack.c.l.b16 %v290
    %v327 = vunpack.c.l.b16 %v291
    %v328 = vunpack.c.l.b16 %v292
    %v329 = vunpack.c.l.b16 %v293
    %v330 = vunpack.c.l.b16 %v294
    %v331 = vpack.c.b16 %v316, %v315
    %v332 = vpack.c.b16 %v318, %v317
    %v333 = vpack.c.b16 %v320, %v319
    %v334 = vpack.c.b16 %v322, %v321
    %v335 = vpack.c.b16 %v324, %v323
    %v336 = vpack.c.b16 %v326, %v325
    %v337 = vpack.c.b16 %v328, %v327
    %v338 = vpack.c.b16 %v330, %v329
    %347 = vmatpush.bf16.msra.mxu0 %v338
    %348 = vmatpush.bf16.msra.mxu0 %v337
    %349 = vmatpush.bf16.msra.mxu0 %v336
    %350 = vmatpush.bf16.msra.mxu0 %v335
    %351 = vmatpush.bf16.msra.mxu0 %v334
    %352 = vmatpush.bf16.msra.mxu0 %v333
    %353 = vmatpush.bf16.msra.mxu0 %v332
    %354 = vmatpush.bf16.msra.mxu0 %v331
    %355 = vmatmul.bf16.gmra.mxu0 %v278
    %v356 = vpop.f32.mrf.mxu0
    %v357 = vadd.f32 %v297, %v356
    %v358 = vpop.f32.mrf.mxu0
    %v359 = vadd.f32 %v297, %v358
    %360 = vdwg.mxu0
    %v361 = vpack.c.bf16 %v357, %v357
    %v362 = vpack.c.bf16 %v359, %v359
    %v364 = vsel %vm193, %v361, 0
    %366 = vmatpush.bf16.msra.mxu0 0
    %367 = vmatpush.bf16.msra.mxu0 0
    %368 = vmatpush.bf16.msra.mxu0 0
    %369 = vmatpush.bf16.msra.mxu0 0
    %370 = vmatpush.bf16.msra.mxu0 0
    %371 = vmatpush.bf16.msra.mxu0 0
    %372 = vmatpush.bf16.msra.mxu0 0
    %373 = vmatpush.bf16.msra.mxu0 %v364
    %374 = vmatmul.bf16.gmra.mxu0 %v191
    %v375 = vpop.f32.mrf.mxu0
    %v376 = vadd.f32 0.0, %v375
    %v377 = vpop.f32.mrf.mxu0
    %378 = vdwg.mxu0
    %v380 = vsel %vm193, %v362, 0
    %382 = vmatpush.bf16.msra.mxu0 0
    %383 = vmatpush.bf16.msra.mxu0 0
    %384 = vmatpush.bf16.msra.mxu0 0
    %385 = vmatpush.bf16.msra.mxu0 0
    %386 = vmatpush.bf16.msra.mxu0 0
    %387 = vmatpush.bf16.msra.mxu0 0
    %388 = vmatpush.bf16.msra.mxu0 0
    %389 = vmatpush.bf16.msra.mxu0 %v380
    %390 = vmatmul.bf16.gmra.mxu0 %v211
    %v391 = vpop.f32.mrf.mxu0
    %v392 = vadd.f32 0.0, %v391
    %v393 = vpop.f32.mrf.mxu0
    %394 = vdwg.mxu0
    %v395 = vadd.f32 %v376, %v392
    %v396 = vrot.slane %v395, 4
    %v397 = vadd.f32 %v395, %v396
    %v398 = vrot.slane %v397, 2
    %v399 = vadd.f32 %v397, %v398
    %v400 = vrot.slane %v399, 1
    %v401 = vadd.f32 %v399, %v400
    %v402 = vmul.f32 %v401, 0.0625
    %v403 = vmul.f32 %v376, %v376
    %v404 = vmul.f32 %v392, %v392
    %v405 = vadd.f32 %v403, %v404
    %v406 = vrot.slane %v405, 4
    %v407 = vadd.f32 %v405, %v406
    %v408 = vrot.slane %v407, 2
    %v409 = vadd.f32 %v407, %v408
    %v410 = vrot.slane %v409, 1
    %v411 = vadd.f32 %v409, %v410
    %v412 = vmul.f32 %v411, 0.0625
    %v413 = vmul.f32 %v402, %v402
    %v414 = vsub.f32 %v412, %v413
    %v415 = vmax.f32 %v414, 0.0
    %v416 = vld [vmem:[%s8] sm:$0x1]
    %v417 = vadd.f32 %v415, 1e-05
    %v418 = vrsqrt.pop %v417
    %v419 = vmul.f32 %v418, %v417
    %v420 = vmul.f32 %v419, %v418
    %v421 = vmul.f32 0.5, %v420
    %v422 = vsub.f32 1.5, %v421
    %v423 = vmul.f32 %v418, %v422
    %vm424 = vweird.f32 %v417
    %vm425 = vweird.f32 %v418
    %vm426 = vmor %vm424, %vm425
    %v427 = vsel %vm426, %v418, %v423
    %v428 = vmul.f32 %v416, %v427
    %v429 = vld [vmem:[%s9] sm:$0x1]
    %v430 = vmul.f32 %v402, %v428
    %v431 = vsub.f32 %v429, %v430
    %v433 = vperm.slane %v428, 0
    %v435 = vmul.f32 %v376, %v433
    %v436 = vmul.f32 %v392, %v433
    %v438 = vperm.slane %v431, 0
    %v440 = vadd.f32 %v435, %v438
    %v441 = vadd.f32 %v436, %v438
    %v442 = vmax.f32 %v440, 0.0
    %v443 = vmax.f32 %v441, 0.0
    %444 = vst [vmem:[#allocation10] sm:$0xff] %v442
    %445 = vst [vmem:[#allocation10 + $0x8] sm:$0xff] %v443
    // Predicated region
    $region58: #{tpu_custom_call.1} parent=1 // pred_check
      _
    $region59: #{tpu_custom_call.1} parent=1 // pred_check_branch
      %447 = sbr.rel (0) target = $region61
    $region60: #{tpu_custom_call.1} parent=1 // pred_region
      %449 = vsyncadd [#allocation4], 0
      %s450 = sshll.u32 [#allocation10], 4
      %s451 = int_to_ptr.vmem [resolvable:$true] %s450
      %s452 = sshll.u32 %s10, 4
      %s453 = int_to_ptr.hbm [resolvable:$true] %s452
      %458 = dma.vmem_to_hbm [thread:$0]  %s451, 256, %s453, [#allocation4], 128, 128, 8
    $region61: #{tpu_custom_call.1} parent=1 // pred_fallthru
      _
    // Predicated region
    $region62: #{tpu_custom_call.1} parent=1 // pred_check
      _
    $region63: #{tpu_custom_call.1} parent=1 // pred_check_branch
      %460 = sbr.rel (0) target = $region65
    $region64: #{tpu_custom_call.1} parent=1 // pred_region
      %462 = dma.done [#allocation4], 256
    $region65: #{tpu_custom_call.1} parent=1 // pred_fallthru
      _
    %463 = vsyncpa [#allocation3], 1
    %464 = vsyncpa [#allocation6], 1
    %465 = vsyncpa [#allocation9], 1
    %466 = vsyncpa [#allocation4], 1

</llo_original>
